<compile_context>
chip_gen: v6e
topology: v6e:2x2x1
jax: 0.10.0
libtpu: 0.0.40
codegen_flags: <defaults>
</compile_context>

<pallas_src>
import functools

import jax
import jax.numpy as jnp
from jax import lax
from jax.experimental import pallas as pl
from jax.experimental.pallas import tpu as pltpu

LANE = 128
SUBLANES = 8

_PARALLEL = getattr(pltpu, "PARALLEL", "parallel")
_ARBITRARY = getattr(pltpu, "ARBITRARY", "arbitrary")
_CORE_PARALLEL = getattr(pltpu, "CORE_PARALLEL", _PARALLEL)


def _cdiv(a, b):
    return -(-a // b)


def _device_config():
    """(num_core_splits, default_block_rows, leading_dim_semantic)."""
    kind = ""
    try:
        kind = jax.devices()[0].device_kind.lower()
    except Exception:
        pass
    if "v5e" in kind or "lite" in kind:   # 1 TC, 16 MiB scoped-VMEM default
        return 1, 2048, _ARBITRARY
    if "v6" in kind:                      # 1 TC, 32 MiB scoped-VMEM default
        return 1, 4096, _ARBITRARY
    if "v7" in kind:                      # 2 TCs per chip
        return 2, 4096, _CORE_PARALLEL
    if "v4" in kind or "v5p" in kind or "v5" in kind:   # classic megacore
        return 2, 2048, _PARALLEL
    return 1, 2048, _ARBITRARY            # unknown: safe defaults


def _wfl_kernel(params_ref, x_ref, y_ref, o_ref, *,
                block_rows, rows_valid, tiles_per_split,
                need_mask, mask_start_tile, static_alpha, static_gamma):
    c = pl.program_id(0)   # core-split axis (each split owns its own acc block)
    i = pl.program_id(1)   # reduction axis ("arbitrary"): acc block is resident

    @pl.when(i == 0)
    def _():
        o_ref[...] = jnp.zeros_like(o_ref)

    x = x_ref[...].astype(jnp.float32)
    y = y_ref[...].astype(jnp.float32)

    # Hard {0,1} labels (the torch module gathers alpha with targets.long()):
    #   z      = (2y - 1) * x
    #   bce    = relu(-z) + log1p(e),  e = exp(-|x|)   (== BCEWithLogitsLoss 'none')
    #   1 - pt = sigmoid(-z) = where(z >= 0, e, 1) / (1 + e)
    # e is reused for both terms: 2 EUP transcendentals + 1 reciprocal per
    # element instead of 5 (no exp(-bce), no log/exp pow, no cancellation).
    z = (2.0 * y - 1.0) * x
    e = jnp.exp(-jnp.abs(x))
    bce = jnp.maximum(-z, 0.0) + jnp.log1p(e)
    # Full-precision divide keeps ~1e-7 parity with the reference; swap to
    # pl.reciprocal(1.0 + e, approx=True) if ~1e-4 relative error is acceptable.
    r = 1.0 / (1.0 + e)
    base = jnp.where(z >= 0.0, e * r, r)          # = 1 - pt

    # at = [alpha, 1-alpha].gather(y)  ==  alpha + (1 - 2*alpha) * y  (one FMA)
    a = float(static_alpha) if static_alpha is not None else params_ref[0]
    at = a + (1.0 - 2.0 * a) * y

    # focal = (1 - pt) ** gamma, specialized at trace time when gamma is static.
    if static_gamma is not None:
        g = float(static_gamma)
        if g == 0.0:
            focal = jnp.ones_like(base)
        elif g == int(g) and 1.0 <= g <= 16.0:
            focal = base
            for _ in range(int(g) - 1):
                focal = focal * base              # gamma=2 -> base*base (pure VALU)
        else:
            lb = jnp.log(jnp.maximum(base, jnp.float32(1e-38)))
            focal = jnp.where(base > 0.0, jnp.exp(jnp.float32(g) * lb), 0.0)
    else:
        g = params_ref[1]
        lb = jnp.log(jnp.maximum(base, jnp.float32(1e-38)))
        focal = jnp.where(base > 0.0, jnp.exp(g * lb), 0.0)

    f = at * focal * bce

    def _accumulate(vals):
        # Sublane-only (pure VPU) partial reduction into the resident (8,128)
        # accumulator; the single cross-lane reduce happens in the wrapper.
        o_ref[0] += vals.reshape(block_rows // SUBLANES, SUBLANES, LANE).sum(axis=0)

    if not need_mask:
        _accumulate(f)                            # steady state: no mask cost
    else:
        global_tile = c * tiles_per_split + i     # unclamped on purpose

        @pl.when(global_tile < mask_start_tile)
        def _():
            _accumulate(f)                        # steady state: no mask cost

        @pl.when(global_tile >= mask_start_tile)
        def _():
            # Last (partial) tile and/or the clamped duplicate tile of the
            # second core split: mask rows beyond the valid data.
            row = lax.broadcasted_iota(jnp.int32, (block_rows, LANE), 0)
            grow = global_tile * block_rows + row
            _accumulate(jnp.where(grow < rows_valid, f, 0.0))


def _focal_terms(x, y, alpha, gamma):
    # torch-form per-element loss (used for the tiny <128-element tail and
    # for sub-1K inputs where a kernel launch is not worth it).
    x = x.astype(jnp.float32)
    y = y.astype(jnp.float32)
    bce = jnp.maximum(x, 0.0) - x * y + jnp.log1p(jnp.exp(-jnp.abs(x)))
    at = alpha + (1.0 - 2.0 * alpha) * y
    pt = jnp.exp(-bce)
    return at * (1.0 - pt) ** gamma * bce


def weighted_focal_loss(inputs, targets, alpha=0.25, gamma=2.0, block_rows=None):
    assert inputs.shape == targets.shape
    n_valid = inputs.size
    x = inputs.reshape(-1)
    y = targets.reshape(-1)

    num_splits_cfg, default_block_rows, leading_sem = _device_config()
    if block_rows is None:
        block_rows = default_block_rows

    # The kernel streams the 128-aligned prefix of the flat input; a <128
    # element misaligned tail is handled by a tiny jnp epilogue (no padded
    # copy of the whole tensor in HBM).
    n_main = (n_valid // LANE) * LANE
    rows = n_main // LANE

    if rows < SUBLANES:
        # Tiny input (< 1024 elements): pure jnp, no kernel launch.
        return jnp.sum(_focal_terms(x, y, alpha, gamma)) / jnp.float32(n_valid)

    tail_sum = None
    if n_main < n_valid:
        tail_sum = jnp.sum(_focal_terms(x[n_main:], y[n_main:], alpha, gamma))

    x2 = (x if n_main == n_valid else x[:n_main]).reshape(rows, LANE)
    y2 = (y if n_main == n_valid else y[:n_main]).reshape(rows, LANE)

    # block_rows: multiple of 8, never larger than rows (partial *last* block
    # is handled in-kernel by the masked accumulate branch).
    block_rows = max(SUBLANES, min(int(block_rows), (rows // SUBLANES) * SUBLANES))
    n_tiles = _cdiv(rows, block_rows)
    num_splits = min(num_splits_cfg, n_tiles)
    tiles_per_split = _cdiv(n_tiles, num_splits)

    need_mask = (rows % block_rows != 0) or (num_splits * tiles_per_split != n_tiles)
    mask_start_tile = rows // block_rows if rows % block_rows else n_tiles

    # Static Python alpha/gamma are baked in at trace time (gamma=2 -> square);
    # the SMEM scalar-prefetch path is only read for traced values.
    static_alpha = float(alpha) if isinstance(alpha, (int, float)) else None
    static_gamma = float(gamma) if isinstance(gamma, (int, float)) else None
    params = jnp.stack([jnp.asarray(alpha, jnp.float32),
                        jnp.asarray(gamma, jnp.float32)])

    kernel = functools.partial(
        _wfl_kernel,
        block_rows=block_rows,
        rows_valid=rows,
        tiles_per_split=tiles_per_split,
        need_mask=need_mask,
        mask_start_tile=mask_start_tile,
        static_alpha=static_alpha,
        static_gamma=static_gamma,
    )

    def data_index_map(c, i, params_ref):
        # Clamp so the DMA stays in-bounds; the duplicate tile (when n_tiles
        # is not a multiple of num_splits) is fully masked in-kernel.
        t = jnp.minimum(c * tiles_per_split + i, n_tiles - 1)
        return (t, 0)

    dim_sem = (leading_sem if num_splits > 1 else _ARBITRARY, _ARBITRARY)

    partials = pl.pallas_call(
        kernel,
        out_shape=jax.ShapeDtypeStruct((num_splits, SUBLANES, LANE), jnp.float32),
        grid_spec=pltpu.PrefetchScalarGridSpec(
            num_scalar_prefetch=1,
            grid=(num_splits, tiles_per_split),
            in_specs=[
                pl.BlockSpec((block_rows, LANE), data_index_map),
                pl.BlockSpec((block_rows, LANE), data_index_map),
            ],
            out_specs=pl.BlockSpec((1, SUBLANES, LANE), lambda c, i, p: (c, 0, 0)),
        ),
        compiler_params=pltpu.CompilerParams(dimension_semantics=dim_sem),
    )(params, x2, y2)

    total = jnp.sum(partials)
    if tail_sum is not None:
        total = total + tail_sum
    return total / jnp.float32(n_valid)


def _reference(inputs, targets, alpha=0.25, gamma=2.0):
    # Direct transcription of the torch module (elementwise alpha gather).
    x = inputs.astype(jnp.float32).reshape(-1)
    y = targets.astype(jnp.float32).reshape(-1)
    bce = jnp.maximum(x, 0.0) - x * y + jnp.log1p(jnp.exp(-jnp.abs(x)))
    at = jnp.where(y.astype(jnp.int32) == 0, alpha, 1.0 - alpha)
    pt = jnp.exp(-bce)
    return jnp.mean(at * (1.0 - pt) ** gamma * bce)


if __name__ == "__main__":
    key = jax.random.PRNGKey(0)
    kx, ky = jax.random.split(key)

    # NCHW inputs, small shapes (lane-aligned path: single full tile).
    inputs = jax.random.normal(kx, (2, 4, 16, 16), dtype=jnp.float32)
    targets = (jax.random.uniform(ky, (2, 4, 16, 16)) > 0.5).astype(jnp.float32)
    loss = weighted_focal_loss(inputs, targets, alpha=0.25, gamma=2.0)
    jax.block_until_ready(loss)
    ref = _reference(inputs, targets, alpha=0.25, gamma=2.0)
    assert jnp.allclose(loss, ref, rtol=1e-5, atol=1e-6), (loss, ref)

    # Misaligned size: exercises the in-kernel partial-tile masking branch and
    # the jnp tail epilogue (no padded copy of the input).
    k2x, k2y = jax.random.split(ky)
    x_odd = jax.random.normal(k2x, (3, 5, 7, 13), dtype=jnp.float32)     # 1365 elems
    y_odd = (jax.random.uniform(k2y, (3, 5, 7, 13)) > 0.5).astype(jnp.float32)
    loss2 = weighted_focal_loss(x_odd, y_odd, alpha=0.25, gamma=2.0)
    jax.block_until_ready(loss2)
    ref2 = _reference(x_odd, y_odd, alpha=0.25, gamma=2.0)
    assert jnp.allclose(loss2, ref2, rtol=1e-5, atol=1e-6), (loss2, ref2)

    print("KERNEL_OK")
</pallas_src>

<mosaic_0001>
module attributes {stable_mosaic.version = 11 : i64} {
  func.func @_wfl_kernel(%arg0: i32, %arg1: i32, %arg2: memref<2xf32, #tpu.memory_space<smem>>, %arg3: memref<16x128xf32, #tpu.memory_space<vmem>>, %arg4: memref<16x128xf32, #tpu.memory_space<vmem>>, %arg5: memref<1x8x128xf32, #tpu.memory_space<vmem>>) attributes {dimension_semantics = [#tpu.dimension_semantics<arbitrary>, #tpu.dimension_semantics<arbitrary>], iteration_bounds = array<i64: 1, 1>, scalar_prefetch = 1 : i64, scratch_operands = 0 : i64, tpu.core_type = #tpu.core_type<tc>, window_params = [{transform_indices = @transform_0, window_bounds = array<i64: 16, 128>}, {transform_indices = @transform_1, window_bounds = array<i64: 16, 128>}, {transform_indices = @transform_2, window_bounds = array<i64: 1, 8, 128>}]} {
    %c0_i32 = arith.constant 0 : i32
    %0 = arith.cmpi eq, %arg1, %c0_i32 : i32
    %1 = arith.extui %0 : i1 to i32
    %c0_i32_0 = arith.constant 0 : i32
    %2 = arith.cmpi ne, %1, %c0_i32_0 : i32
    scf.if %2 {
      %cst_20 = arith.constant 0.000000e+00 : f32
      %43 = vector.broadcast %cst_20 : f32 to vector<1x8x128xf32>
      %c0_21 = arith.constant 0 : index
      %c0_22 = arith.constant 0 : index
      %c0_23 = arith.constant 0 : index
      %44 = vector.load %arg5[%c0_21, %c0_22, %c0_23] : memref<1x8x128xf32, #tpu.memory_space<vmem>>, vector<1x8x128xf32>
      tpu.vector_store %arg5[%c0_21, %c0_22, %c0_23], %43 {strides = array<i32>} : memref<1x8x128xf32, #tpu.memory_space<vmem>>, vector<1x8x128xf32>,
    } else {
    }
    %c0 = arith.constant 0 : index
    %c0_1 = arith.constant 0 : index
    %3 = vector.load %arg3[%c0, %c0_1] : memref<16x128xf32, #tpu.memory_space<vmem>>, vector<16x128xf32>
    %c0_2 = arith.constant 0 : index
    %c0_3 = arith.constant 0 : index
    %4 = vector.load %arg4[%c0_2, %c0_3] : memref<16x128xf32, #tpu.memory_space<vmem>>, vector<16x128xf32>
    %cst = arith.constant 2.000000e+00 : f32
    %5 = vector.broadcast %cst : f32 to vector<16x128xf32>
    %6 = arith.mulf %5, %4 : vector<16x128xf32>
    %cst_4 = arith.constant 1.000000e+00 : f32
    %7 = vector.broadcast %cst_4 : f32 to vector<16x128xf32>
    %8 = arith.subf %6, %7 : vector<16x128xf32>
    %9 = arith.mulf %8, %3 : vector<16x128xf32>
    %10 = math.absf %3 : vector<16x128xf32>
    %cst_5 = arith.constant 0.000000e+00 : f32
    %11 = vector.broadcast %cst_5 : f32 to vector<16x128xf32>
    %12 = arith.subf %11, %10 : vector<16x128xf32>
    %13 = math.exp %12 : vector<16x128xf32>
    %cst_6 = arith.constant 0.000000e+00 : f32
    %14 = vector.broadcast %cst_6 : f32 to vector<16x128xf32>
    %15 = arith.subf %14, %9 : vector<16x128xf32>
    %cst_7 = arith.constant 0.000000e+00 : f32
    %16 = vector.broadcast %cst_7 : f32 to vector<16x128xf32>
    %17 = arith.maximumf %15, %16 : vector<16x128xf32>
    %18 = math.log1p %13 : vector<16x128xf32>
    %19 = arith.addf %17, %18 : vector<16x128xf32>
    %cst_8 = arith.constant 1.000000e+00 : f32
    %20 = vector.broadcast %cst_8 : f32 to vector<16x128xf32>
    %21 = arith.addf %20, %13 : vector<16x128xf32>
    %cst_9 = arith.constant 1.000000e+00 : f32
    %22 = vector.broadcast %cst_9 : f32 to vector<16x128xf32>
    %23 = arith.divf %22, %21 : vector<16x128xf32>
    %cst_10 = arith.constant 0.000000e+00 : f32
    %24 = vector.broadcast %cst_10 : f32 to vector<16x128xf32>
    %25 = arith.cmpf oge, %9, %24 : vector<16x128xf32>
    %26 = arith.mulf %13, %23 : vector<16x128xf32>
    %27 = arith.select %25, %26, %23 : vector<16x128xi1>, vector<16x128xf32>
    %cst_11 = arith.constant 5.000000e-01 : f32
    %28 = vector.broadcast %cst_11 : f32 to vector<16x128xf32>
    %29 = arith.mulf %28, %4 : vector<16x128xf32>
    %cst_12 = arith.constant 2.500000e-01 : f32
    %30 = vector.broadcast %cst_12 : f32 to vector<16x128xf32>
    %31 = arith.addf %30, %29 : vector<16x128xf32>
    %32 = arith.mulf %27, %27 : vector<16x128xf32>
    %33 = arith.mulf %31, %32 : vector<16x128xf32>
    %34 = arith.mulf %33, %19 : vector<16x128xf32>
    %c0_13 = arith.constant 0 : index
    %c0_14 = arith.constant 0 : index
    %c0_15 = arith.constant 0 : index
    %35 = vector.load %arg5[%c0_13, %c0_14, %c0_15] : memref<1x8x128xf32, #tpu.memory_space<vmem>>, vector<1x8x128xf32>
    %36 = vector.shape_cast %35 : vector<1x8x128xf32> to vector<8x128xf32>
    %37 = vector.shape_cast %34 : vector<16x128xf32> to vector<2x8x128xf32>
    %cst_16 = arith.constant dense<0.000000e+00> : vector<8x128xf32>
    %38 = vector.multi_reduction <add>, %37, %cst_16 [0] : vector<2x8x128xf32> to vector<8x128xf32>
    %39 = arith.addf %36, %38 : vector<8x128xf32>
    %c0_17 = arith.constant 0 : index
    %c0_18 = arith.constant 0 : index
    %c0_19 = arith.constant 0 : index
    %40 = vector.load %arg5[%c0_17, %c0_18, %c0_19] : memref<1x8x128xf32, #tpu.memory_space<vmem>>, vector<1x8x128xf32>
    %41 = vector.shape_cast %40 : vector<1x8x128xf32> to vector<8x128xf32>
    %42 = vector.shape_cast %39 : vector<8x128xf32> to vector<1x8x128xf32>
    tpu.vector_store %arg5[%c0_17, %c0_18, %c0_19], %42 {strides = array<i32>} : memref<1x8x128xf32, #tpu.memory_space<vmem>>, vector<1x8x128xf32>,
    return
  }
  func.func @transform_0(%arg0: i32, %arg1: i32, %arg2: memref<2xf32, #tpu.memory_space<smem>>) -> (i32, i32) {
    %c1_i32 = arith.constant 1 : i32
    %0 = arith.muli %arg0, %c1_i32 : i32
    %1 = arith.addi %0, %arg1 : i32
    %c0_i32 = arith.constant 0 : i32
    %2 = arith.minsi %1, %c0_i32 : i32
    %c0_i32_0 = arith.constant 0 : i32
    %c0_i32_1 = arith.constant 0 : i32
    return %2, %c0_i32_0 : i32, i32
  }
  func.func @transform_1(%arg0: i32, %arg1: i32, %arg2: memref<2xf32, #tpu.memory_space<smem>>) -> (i32, i32) {
    %c1_i32 = arith.constant 1 : i32
    %0 = arith.muli %arg0, %c1_i32 : i32
    %1 = arith.addi %0, %arg1 : i32
    %c0_i32 = arith.constant 0 : i32
    %2 = arith.minsi %1, %c0_i32 : i32
    %c0_i32_0 = arith.constant 0 : i32
    %c0_i32_1 = arith.constant 0 : i32
    return %2, %c0_i32_0 : i32, i32
  }
  func.func @transform_2(%arg0: i32, %arg1: i32, %arg2: memref<2xf32, #tpu.memory_space<smem>>) -> (i32, i32, i32) {
    %c0_i32 = arith.constant 0 : i32
    %c0_i32_0 = arith.constant 0 : i32
    %c0_i32_1 = arith.constant 0 : i32
    return %arg0, %c0_i32, %c0_i32_0 : i32, i32, i32
  }
}

</mosaic_0001>

<llo_original>
// kernel: tpu_custom_call.1
$region0: #{tpu_custom_call.1}
  #allocation0 [shape = 'u32[]', space=smem, size = 0x4, offset = 0x4, fixed_abs, tag = 'smem constant byte address 0x4 - core index']
  #allocation1 [shape = 'u32[144,128]{1,0:T(1,128)}', space=vmem, size = 0x12000, scoped, tag = 'internal scratch']
  #allocation2 [shape = 's32[1]{0}', space=sflag, size = 0x4, scoped, tag = 'scoped memory for tpu_custom_call.1']
  #allocation3 [shape = 'u8[512]{0}', space=smem, size = 0x200, scoped, tag = 'prefetched SMEM operand 0']
  %s0 = inlined_call_operand.hbm [shape: f32[2], index: 0, kind: input, shape index: {}]
  %s1 = inlined_call_operand.hbm [shape: f32[16,128], index: 1, kind: input, shape index: {}]
  %s2 = inlined_call_operand.hbm [shape: f32[16,128], index: 2, kind: input, shape index: {}]
  %s3 = inlined_call_operand.hbm [shape: f32[1,8,128], index: 3, kind: output, shape index: {}]
  %s4 = sld [smem:[#allocation0]]
  $region30: #{tpu_custom_call.1} parent=0
    _
  %s6 = ssub.s32 1, %s4
  %s7 = scalar_select 0, %s6, %s4
  %9 = dma.hbm_to_smem %s0, 16, [#allocation3], [#allocation2]
  %10 = dma.done [#allocation2], 16
  %11 = sfence
  $region1: #{tpu_custom_call.1} parent=0
    #allocation4 [shape = 'u8[8192]{0}', space=vmem, size = 0x2000, scoped, tag = 'input window, operand 1, single buffered']
    #allocation5 [shape = 's32[1]{0}', space=sflag, size = 0x4, scoped, tag = 'scoped memory for tpu_custom_call.1']
    #allocation6 [shape = 's32[1]{0}', space=sflag, size = 0x4, scoped, tag = 'scoped memory for tpu_custom_call.1']
    #allocation7 [shape = 'u8[8192]{0}', space=vmem, size = 0x2000, scoped, tag = 'input window, operand 2, single buffered']
    #allocation8 [shape = 's32[1]{0}', space=sflag, size = 0x4, scoped, tag = 'scoped memory for tpu_custom_call.1']
    #allocation9 [shape = 'u8[4096]{0}', space=vmem, size = 0x1000, scoped, tag = 'output window, operand 0, single buffered']
    %12 = vsyncpa [#allocation5], 0
    %13 = vsyncpa [#allocation8], 0
    %14 = vsyncpa [#allocation6], 0
    // Predicated region
    $region2: #{tpu_custom_call.1} parent=1 // pred_check
      _
    $region3: #{tpu_custom_call.1} parent=1 // pred_check_branch
      %16 = sbr.rel (0) target = $region5
    $region4: #{tpu_custom_call.1} parent=1 // pred_region
      %s17 = sadd.s32 0, 0
      %p18 = scmp.lt.s32.totalorder %s17, 0
      %s19 = scalar_select %p18, %s17, 0
      %s20 = smul.u32 2, %s19
      %s22 = ssub.s32 256, 256
      %23 = vsyncadd [#allocation5], %s22
      %s24 = smul.addr %s20, 128
      %s25 = scalar_lea.hbm %s1, %s24
      %s26 = sshll.u32 [#allocation4], 4
      %s27 = int_to_ptr.vmem [resolvable:$true] %s26
      %32 = dma.hbm_to_vmem [thread:$0]  %s25, 256, %s27, [#allocation5], 128, 128, 8
    $region5: #{tpu_custom_call.1} parent=1 // pred_fallthru
      _
    // Predicated region
    $region6: #{tpu_custom_call.1} parent=1 // pred_check
      _
    $region7: #{tpu_custom_call.1} parent=1 // pred_check_branch
      %34 = sbr.rel (0) target = $region9
    $region8: #{tpu_custom_call.1} parent=1 // pred_region
      %s35 = sadd.s32 0, 0
      %p36 = scmp.lt.s32.totalorder %s35, 0
      %s37 = scalar_select %p36, %s35, 0
      %s38 = smul.u32 2, %s37
      %s40 = ssub.s32 256, 256
      %41 = vsyncadd [#allocation8], %s40
      %s42 = smul.addr %s38, 128
      %s43 = scalar_lea.hbm %s2, %s42
      %s44 = sshll.u32 [#allocation7], 4
      %s45 = int_to_ptr.vmem [resolvable:$true] %s44
      %50 = dma.hbm_to_vmem [thread:$0]  %s43, 256, %s45, [#allocation8], 128, 128, 8
    $region9: #{tpu_custom_call.1} parent=1 // pred_fallthru
      _
    // Predicated region
    $region10: #{tpu_custom_call.1} parent=1 // pred_check
      _
    $region11: #{tpu_custom_call.1} parent=1 // pred_check_branch
      %52 = sbr.rel (0) target = $region13
    $region12: #{tpu_custom_call.1} parent=1 // pred_region
      %53 = dma.done [#allocation5], 256
    $region13: #{tpu_custom_call.1} parent=1 // pred_fallthru
      _
    // Predicated region
    $region14: #{tpu_custom_call.1} parent=1 // pred_check
      _
    $region15: #{tpu_custom_call.1} parent=1 // pred_check_branch
      %55 = sbr.rel (0) target = $region17
    $region16: #{tpu_custom_call.1} parent=1 // pred_region
      %56 = dma.done [#allocation8], 256
    $region17: #{tpu_custom_call.1} parent=1 // pred_fallthru
      _
    %s57 = sadd.s32 0, 0
    %p58 = scmp.lt.s32.totalorder %s57, 0
    %s59 = scalar_select %p58, %s57, 0
    %s60 = smul.u32 2, %s59
    %s61 = sadd.s32 0, 0
    %p62 = scmp.lt.s32.totalorder %s61, 0
    %s63 = scalar_select %p62, %s61, 0
    %s64 = smul.u32 2, %s63
    %p65 = scmp.eq.s32.totalorder 0, 0
    // Predicated region
    $region18: #{tpu_custom_call.1} parent=1 // pred_check
      %p66 = pneg %p65
    $region19: #{tpu_custom_call.1} parent=1 // pred_check_branch
      %68 = sbr.rel (%p66) target = $region21
    $region20: #{tpu_custom_call.1} parent=1 // pred_region
      %69 = vst [vmem:[#allocation9] sm:$0xff] 0.0
    $region21: #{tpu_custom_call.1} parent=1 // pred_fallthru
      _
    %v70 = vld [vmem:[#allocation4] sm:$0xff]
    %v71 = vld [vmem:[#allocation4 + $0x8] sm:$0xff]
    %v72 = vld [vmem:[#allocation7] sm:$0xff]
    %v73 = vld [vmem:[#allocation7 + $0x8] sm:$0xff]
    %v74 = vmul.f32 %v72, 2.0
    %v75 = vmul.f32 %v73, 2.0
    %v76 = vsub.f32 %v74, 1.0
    %v77 = vsub.f32 %v75, 1.0
    %v78 = vmul.f32 %v76, %v70
    %v79 = vmul.f32 %v77, %v71
    %v80 = vand.u32 2147483647, %v70
    %v81 = vand.u32 2147483647, %v71
    %v82 = vsub.f32 0.0, %v80
    %v83 = vsub.f32 0.0, %v81
    %v84 = vmul.f32 %v82, 1.442695
    %v85 = vpow.pop %v84
    %v86 = vmul.f32 %v83, 1.442695
    %v87 = vpow.pop %v86
    %v88 = vsub.f32 0.0, %v78
    %v89 = vsub.f32 0.0, %v79
    %v90 = vmax.f32 %v88, 0.0
    %v91 = vmax.f32 %v89, 0.0
    %v92 = vadd.f32 %v85, 1.0
    %v93 = vlog2.pop %v92
    %v94 = vmul.f32 %v93, 0.6931472
    %v95 = vmul.f32 -0.5, %v85
    %v96 = vadd.f32 %v95, 1.0
    %v97 = vmul.f32 %v96, %v85
    %v98 = vand.u32 2147483647, %v85
    %vm99 = vcmp.lt.f32.partialorder %v98, 0.0004427343
    %v100 = vsel %vm99, %v97, %v94
    %v101 = vadd.f32 %v87, 1.0
    %v102 = vlog2.pop %v101
    %v103 = vmul.f32 %v102, 0.6931472
    %v104 = vmul.f32 -0.5, %v87
    %v105 = vadd.f32 %v104, 1.0
    %v106 = vmul.f32 %v105, %v87
    %v107 = vand.u32 2147483647, %v87
    %vm108 = vcmp.lt.f32.partialorder %v107, 0.0004427343
    %v109 = vsel %vm108, %v106, %v103
    %v110 = vadd.f32 %v90, %v100
    %v111 = vadd.f32 %v91, %v109
    %v112 = vadd.f32 %v85, 1.0
    %v113 = vadd.f32 %v87, 1.0
    %v114 = vrcp.pop %v112
    %v115 = vmul.f32 1.0, %v114
    %v116 = vrcp.pop %v113
    %v117 = vmul.f32 1.0, %v116
    %vm118 = vcmp.ge.f32.partialorder %v78, 0.0
    %vm119 = vcmp.ge.f32.partialorder %v79, 0.0
    %v120 = vmul.f32 %v85, %v115
    %v121 = vmul.f32 %v87, %v117
    %v122 = vsel %vm118, %v120, %v115
    %v123 = vsel %vm119, %v121, %v117
    %v124 = vmul.f32 %v72, 0.5
    %v125 = vmul.f32 %v73, 0.5
    %v126 = vadd.f32 %v124, 0.25
    %v127 = vadd.f32 %v125, 0.25
    %v128 = vmul.f32 %v122, %v122
    %v129 = vmul.f32 %v123, %v123
    %v130 = vmul.f32 %v126, %v128
    %v131 = vmul.f32 %v127, %v129
    %v132 = vmul.f32 %v130, %v110
    %v133 = vmul.f32 %v131, %v111
    %v134 = vld [vmem:[#allocation9] sm:$0xff]
    %v135 = vadd.f32 %v132, %v133
    %v136 = vadd.f32 %v134, %v135
    %137 = vst [vmem:[#allocation9] sm:$0xff] %v136
    // Predicated region
    $region22: #{tpu_custom_call.1} parent=1 // pred_check
      _
    $region23: #{tpu_custom_call.1} parent=1 // pred_check_branch
      %139 = sbr.rel (0) target = $region25
    $region24: #{tpu_custom_call.1} parent=1 // pred_region
      %s141 = ssub.s32 128, 128
      %142 = vsyncadd [#allocation6], %s141
      %s144 = sshll.u32 [#allocation9], 4
      %s145 = int_to_ptr.vmem [resolvable:$true] %s144
      %147 = dma.vmem_to_hbm [thread:$0]  %s145, 128, %s3, [#allocation6]
    $region25: #{tpu_custom_call.1} parent=1 // pred_fallthru
      _
    // Predicated region
    $region26: #{tpu_custom_call.1} parent=1 // pred_check
      _
    $region27: #{tpu_custom_call.1} parent=1 // pred_check_branch
      %149 = sbr.rel (0) target = $region29
    $region28: #{tpu_custom_call.1} parent=1 // pred_region
      %150 = dma.done [#allocation6], 128
    $region29: #{tpu_custom_call.1} parent=1 // pred_fallthru
      _
    %151 = vsyncpa [#allocation5], 1
    %152 = vsyncpa [#allocation8], 1
    %153 = vsyncpa [#allocation6], 1

</llo_original>
